<compile_context>
chip_gen: v7x
topology: tpu7x:2x2x1
jax: 0.10.0
libtpu: 0.0.40
codegen_flags: <defaults>
</compile_context>

<pallas_src>
import math

import jax
import jax.numpy as jnp
from jax.experimental import pallas as pl
from jax.experimental.pallas import tpu as pltpu


def _ocn_merge_kernel(o1_ref, cmp_ref, gq_ref,
                      w_o1_ref, p_bias_ref, wc_w_ref, wg2_w_ref,
                      out_ref):
    f32 = jnp.float32
    o1 = o1_ref[0]                                   # (TL, H), bf16 stream dtype
    H = o1.shape[-1]
    n_cmp = cmp_ref.shape[1]

    # --- fused o1 matmul against [Wc_self^T | Wg_o1^T]: one bf16 MXU pass ----
    po = jnp.dot(o1, w_o1_ref[...], preferred_element_type=f32)   # (TL, 2H) f32
    p = po[:, :H] + p_bias_ref[...]                  # Wc_self(o1) + (b_self + C*b_c)
    gpre = po[:, H:] + gq_ref[0]                     # o1 gate half + (Q-gate + b_g)

    # --- sum_c Wc(compare_c) == (sum_c compare_c) @ Wc^T  (bias already folded)
    if n_cmp > 0:
        csum = jnp.sum(cmp_ref[0].astype(f32), axis=0)            # (TL, 2H), VPU f32
        p = p + jnp.dot(csum.astype(o1.dtype), wc_w_ref[...],     # bf16 MXU pass
                        preferred_element_type=f32)

    ock = jnp.tanh(p)                                # (TL, H) f32

    # --- gate: OCK slice of Wg, bf16 LHS ------------------------------------
    gpre = gpre + jnp.dot(ock.astype(o1.dtype), wg2_w_ref[...],
                          preferred_element_type=f32)
    g = jax.nn.sigmoid(gpre)

    o1f = o1.astype(f32)
    out_ref[0] = (g * o1f + (1.0 - g) * ock).astype(out_ref.dtype)


def _gate_q_bias(q, q_mask, params):
    """softmax-pooled question vector folded through the Q-slice of Wg (+ bias).

    Shared by the wrapper and the reference so both see bit-identical values.
    """
    f32 = jnp.float32
    H = q.shape[-1]
    hi = jax.lax.Precision.HIGHEST
    q_f = q.astype(f32)
    mbias = (1.0 - q_mask.astype(f32)) * (-10000.0)                   # (B, Lq)
    scores = (jnp.einsum("bqh,oh->bqo", q_f, params["va_w"].astype(f32),
                         precision=hi)
              + params["va_b"].astype(f32) + mbias[..., None])        # (B, Lq, 1)
    aq = jax.nn.softmax(scores, axis=1)
    q_vec = jnp.einsum("bqh,bqo->bh", q_f, aq, precision=hi)          # (B, H)
    wg_q = params["wg_w"].astype(f32)[:, 2 * H:]                      # (H, H)
    return (jnp.einsum("bh,oh->bo", q_vec, wg_q, precision=hi)
            + params["wg_b"].astype(f32))                             # (B, H)


def _vmem_limit_cap():
    """Generation-aware cap for the scoped VMEM limit."""
    try:
        cap = int(pltpu.get_tpu_info().vmem_capacity_bytes)
    except Exception:
        cap = 64 << 20                               # conservative (v7x-like)
    # v7x has 64 MiB of physical VMEM per TC -> keep scoped limit at 40 MiB;
    # v5e/v6e have 128 MiB -> allow bigger tiles.
    return (40 << 20) if cap <= (64 << 20) else (96 << 20)


def _pick_l_tile(L, n_cmp, H, stream_bytes, out_bytes, budget_bytes):
    """Largest L tile whose double-buffered streams + f32 temps fit the budget."""
    per_row = (2 * ((n_cmp * 2 * H + H) * stream_bytes + H * out_bytes)  # dbl-buf streams
               + (2 * n_cmp * H + 10 * H) * 4)                           # f32 temporaries
    fixed = 2 * (5 * H * H * stream_bytes + 4 * H * 4)                   # dbl-buf weights
    rows = (budget_bytes - fixed) // max(per_row, 1)
    if rows >= L:
        return L
    return int(max(16, min(1024, (rows // 16) * 16)))


def ocn_merge_layer(o1, compare, q, q_mask, params, *,
                    stream_dtype=jnp.bfloat16, out_dtype=None, l_tile=None):
    """Forward pass of OCN_Merge_layer.

    o1:      (B, L, H)      compare: (B, C, L, 2H)  (stacked compare_list)
    q:       (B, Lq, H)     q_mask:  (B, Lq)  (1 = valid question token)
    """
    B, L, H = o1.shape
    Cn = compare.shape[1]
    f32 = jnp.float32
    sd = jnp.dtype(stream_dtype)
    out_dtype = jnp.dtype(o1.dtype) if out_dtype is None else jnp.dtype(out_dtype)

    # --- per-batch question pooling + Q-gate bias (tiny, once per batch) -----
    gq = _gate_q_bias(q, q_mask, params).reshape(B, 1, H).astype(f32)

    # --- weights: pre-transposed, bf16, fused where they share an LHS --------
    w_o1 = jnp.concatenate([params["wc_self_w"].T,
                            params["wg_w"][:, :H].T], axis=1).astype(sd)  # (H, 2H)
    wc_w = params["wc_w"].T.astype(sd)                                    # (2H, H)
    wg2_w = params["wg_w"][:, H:2 * H].T.astype(sd)                       # (H, H)
    p_bias = (params["wc_self_b"]
              + float(Cn) * params["wc_b"]).reshape(1, H).astype(f32)     # (1, H)

    # Streaming tensors in a narrow dtype (HBM-bandwidth bound on `compare`).
    o1_s = o1.astype(sd)
    cmp_s = compare.astype(sd)

    sbytes = sd.itemsize
    obytes = jnp.dtype(out_dtype).itemsize
    limit_cap = _vmem_limit_cap()
    TL = l_tile if l_tile is not None else _pick_l_tile(
        L, Cn, H, sbytes, obytes, budget_bytes=limit_cap - (8 << 20))
    TL = min(TL, L)
    n_lt = pl.cdiv(L, TL)

    # VMEM accounting: double-buffered streams + weights + f32 temporaries.
    est = (2 * TL * ((Cn * 2 * H + H) * sbytes + H * obytes)
           + TL * (2 * Cn * H + 10 * H) * 4
           + 2 * (5 * H * H * sbytes + 4 * H * 4))
    vmem_limit = int(min(max(est + (4 << 20), 32 << 20), limit_cap))

    bmap_l = lambda b, l: (b, l, 0)      # tiled along L
    bmap_c = lambda b, l: (b, 0, l, 0)   # compare tiled along L
    bmap_b = lambda b, l: (b, 0, 0)      # per-batch constant (not re-DMA'd per tile)
    wmap = lambda b, l: (0, 0)           # weights: constant block index

    return pl.pallas_call(
        _ocn_merge_kernel,
        out_shape=jax.ShapeDtypeStruct((B, L, H), out_dtype),
        grid_spec=pltpu.PrefetchScalarGridSpec(
            num_scalar_prefetch=0,
            grid=(B, n_lt),
            in_specs=[
                pl.BlockSpec((1, TL, H), bmap_l),            # o1 tile (bf16)
                pl.BlockSpec((1, Cn, TL, 2 * H), bmap_c),    # compare tile (bf16)
                pl.BlockSpec((1, 1, H), bmap_b),             # Q-gate bias (f32)
                pl.BlockSpec((H, 2 * H), wmap),              # [Wc_self^T | Wg_o1^T]
                pl.BlockSpec((1, H), wmap),                  # b_self + C*b_c (f32)
                pl.BlockSpec((2 * H, H), wmap),              # Wc^T (bf16)
                pl.BlockSpec((H, H), wmap),                  # Wg_ock^T (bf16)
            ],
            out_specs=pl.BlockSpec((1, TL, H), bmap_l),
        ),
        compiler_params=pltpu.CompilerParams(
            dimension_semantics=("parallel", "parallel"),
            vmem_limit_bytes=vmem_limit),
    )(o1_s, cmp_s, gq, w_o1, p_bias, wc_w, wg2_w)


# ----------------------------- references (pure JAX) -------------------------
def ref_forward(o1, compare_list, q, q_mask, params):
    """Full-f32 equivalent of the torch module (semantics check, loose tol)."""
    qm = (1.0 - q_mask.astype(jnp.float32)) * -10000.0
    va = q @ params["va_w"].T + params["va_b"]                      # (B, Lq, 1)
    aq = jax.nn.softmax(va + qm[..., None], axis=1)
    q_vec = jnp.einsum("bqh,bqo->boh", q, aq)                       # (B, 1, H)
    Q = jnp.broadcast_to(q_vec, o1.shape)
    p = o1 @ params["wc_self_w"].T + params["wc_self_b"]
    for o in compare_list:
        p = p + o @ params["wc_w"].T + params["wc_b"]
    ock = jnp.tanh(p)
    gin = jnp.concatenate([o1, ock, Q], axis=2)
    g = jax.nn.sigmoid(gin @ params["wg_w"].T + params["wg_b"])
    return g * o1 + (1.0 - g) * ock


def ref_forward_bf16_mirror(o1, compare, q, q_mask, params):
    """Mirrors the kernel's bf16 streaming / bf16-MXU quantization exactly
    (f32 accumulation + f32 elementwise) for a tight tolerance check."""
    f32 = jnp.float32
    H = o1.shape[-1]
    Cn = compare.shape[1]
    deq = lambda x: x.astype(jnp.bfloat16).astype(f32)
    wg = params["wg_w"]
    gq = _gate_q_bias(q, q_mask, params)[:, None, :]                # (B, 1, H)
    o1q = deq(o1)
    p = (o1q @ deq(params["wc_self_w"]).T
         + params["wc_self_b"] + float(Cn) * params["wc_b"])
    csum = jnp.sum(deq(compare), axis=1)                            # f32 sum of bf16
    p = p + deq(csum) @ deq(params["wc_w"]).T
    ock = jnp.tanh(p)
    gpre = (o1q @ deq(wg[:, :H]).T + gq
            + deq(ock) @ deq(wg[:, H:2 * H]).T)
    g = jax.nn.sigmoid(gpre)
    return g * o1q + (1.0 - g) * ock


def _init_linear(key, in_features, out_features):
    k1, k2 = jax.random.split(key)
    bound = 1.0 / math.sqrt(in_features)
    w = jax.random.uniform(k1, (out_features, in_features), jnp.float32,
                           -bound, bound)
    b = jax.random.uniform(k2, (out_features,), jnp.float32, -bound, bound)
    return w, b


if __name__ == "__main__":
    B, L, H, Lq, C = 2, 8, 32, 8, 3

    key = jax.random.PRNGKey(0)
    k_o1, k_cmp, k_q, k_w1, k_w2, k_w3, k_w4 = jax.random.split(key, 7)

    o1 = jax.random.normal(k_o1, (B, L, H), jnp.float32)
    compare = jax.random.normal(k_cmp, (B, C, L, 2 * H), jnp.float32)
    q = jax.random.normal(k_q, (B, Lq, H), jnp.float32)
    # binary question mask (1 = valid token); second example padded after 5 tokens
    lens = jnp.array([Lq, 5])
    q_mask = (jnp.arange(Lq)[None, :] < lens[:, None]).astype(jnp.float32)

    wc_self_w, wc_self_b = _init_linear(k_w1, H, H)
    wc_w, wc_b = _init_linear(k_w2, 2 * H, H)
    va_w, va_b = _init_linear(k_w3, H, 1)
    wg_w, wg_b = _init_linear(k_w4, 3 * H, H)
    params = dict(wc_self_w=wc_self_w, wc_self_b=wc_self_b,
                  wc_w=wc_w, wc_b=wc_b,
                  va_w=va_w, va_b=va_b,
                  wg_w=wg_w, wg_b=wg_b)

    out = ocn_merge_layer(o1, compare, q, q_mask, params)
    out = jax.block_until_ready(out)
    assert out.shape == (B, L, H)

    with jax.default_matmul_precision("highest"):
        expected_q = ref_forward_bf16_mirror(o1, compare, q, q_mask, params)
        expected_f32 = ref_forward(o1, [compare[:, c] for c in range(C)],
                                   q, q_mask, params)

    # Tight check against a reference with identical bf16 quantization / f32 math.
    err_q = float(jnp.max(jnp.abs(out - expected_q)))
    assert jnp.allclose(out, expected_q, atol=2e-3, rtol=2e-3), err_q
    # Loose check against the exact f32 torch-equivalent (bf16 streaming noise).
    err_f = float(jnp.max(jnp.abs(out - expected_f32)))
    assert jnp.allclose(out, expected_f32, atol=1e-1, rtol=1e-1), err_f

    print("KERNEL_OK")
</pallas_src>

<mosaic_0001>
module attributes {stable_mosaic.version = 11 : i64} {
  func.func @_ocn_merge_kernel(%arg0: i32, %arg1: i32, %arg2: memref<1x8x32xbf16, #tpu.memory_space<vmem>>, %arg3: memref<1x3x8x64xbf16, #tpu.memory_space<vmem>>, %arg4: memref<1x1x32xf32, #tpu.memory_space<vmem>>, %arg5: memref<32x64xbf16, #tpu.memory_space<vmem>>, %arg6: memref<1x32xf32, #tpu.memory_space<vmem>>, %arg7: memref<64x32xbf16, #tpu.memory_space<vmem>>, %arg8: memref<32x32xbf16, #tpu.memory_space<vmem>>, %arg9: memref<1x8x32xf32, #tpu.memory_space<vmem>>) attributes {dimension_semantics = [#tpu.dimension_semantics<parallel>, #tpu.dimension_semantics<parallel>], iteration_bounds = array<i64: 2, 1>, scalar_prefetch = 0 : i64, scratch_operands = 0 : i64, tpu.core_type = #tpu.core_type<tc>, window_params = [{transform_indices = @transform_0, window_bounds = array<i64: 1, 8, 32>}, {transform_indices = @transform_1, window_bounds = array<i64: 1, 3, 8, 64>}, {transform_indices = @transform_2, window_bounds = array<i64: 1, 1, 32>}, {pipeline_mode = #tpu.pipeline_mode<synchronous>, transform_indices = @transform_3, window_bounds = array<i64: 32, 64>}, {pipeline_mode = #tpu.pipeline_mode<synchronous>, transform_indices = @transform_4, window_bounds = array<i64: 1, 32>}, {pipeline_mode = #tpu.pipeline_mode<synchronous>, transform_indices = @transform_5, window_bounds = array<i64: 64, 32>}, {pipeline_mode = #tpu.pipeline_mode<synchronous>, transform_indices = @transform_6, window_bounds = array<i64: 32, 32>}, {transform_indices = @transform_7, window_bounds = array<i64: 1, 8, 32>}]} {
    %c0 = arith.constant 0 : index
    %c0_0 = arith.constant 0 : index
    %c0_1 = arith.constant 0 : index
    %0 = vector.load %arg2[%c0, %c0_0, %c0_1] : memref<1x8x32xbf16, #tpu.memory_space<vmem>>, vector<1x8x32xbf16>
    %1 = vector.shape_cast %0 : vector<1x8x32xbf16> to vector<8x32xbf16>
    %c0_2 = arith.constant 0 : index
    %c0_3 = arith.constant 0 : index
    %2 = vector.load %arg5[%c0_2, %c0_3] : memref<32x64xbf16, #tpu.memory_space<vmem>>, vector<32x64xbf16>
    %cst = arith.constant dense<0.000000e+00> : vector<8x64xf32>
    %3 = tpu.matmul %1, %2, %cst {dimension_numbers = #tpu.dot_dimension_numbers<[1], [0], [0], [1], [0, 0, 1, 1], [], []>} : vector<8x32xbf16>, vector<32x64xbf16>, vector<8x64xf32> -> vector<8x64xf32>
    %4 = vector.extract_strided_slice %3 {offsets = [0, 0], sizes = [8, 32], strides = [1, 1]} : vector<8x64xf32> to vector<8x32xf32>
    %c0_4 = arith.constant 0 : index
    %c0_5 = arith.constant 0 : index
    %5 = vector.load %arg6[%c0_4, %c0_5] : memref<1x32xf32, #tpu.memory_space<vmem>>, vector<1x32xf32>
    %6 = vector.broadcast %5 : vector<1x32xf32> to vector<8x32xf32>
    %7 = arith.addf %4, %6 : vector<8x32xf32>
    %8 = vector.extract_strided_slice %3 {offsets = [0, 32], sizes = [8, 32], strides = [1, 1]} : vector<8x64xf32> to vector<8x32xf32>
    %c0_6 = arith.constant 0 : index
    %c0_7 = arith.constant 0 : index
    %c0_8 = arith.constant 0 : index
    %9 = vector.load %arg4[%c0_6, %c0_7, %c0_8] : memref<1x1x32xf32, #tpu.memory_space<vmem>>, vector<1x1x32xf32>
    %10 = vector.shape_cast %9 : vector<1x1x32xf32> to vector<1x32xf32>
    %11 = vector.broadcast %10 : vector<1x32xf32> to vector<8x32xf32>
    %12 = arith.addf %8, %11 : vector<8x32xf32>
    %c0_9 = arith.constant 0 : index
    %c0_10 = arith.constant 0 : index
    %c0_11 = arith.constant 0 : index
    %c0_12 = arith.constant 0 : index
    %13 = vector.load %arg3[%c0_9, %c0_10, %c0_11, %c0_12] : memref<1x3x8x64xbf16, #tpu.memory_space<vmem>>, vector<1x3x8x64xbf16>
    %14 = vector.shape_cast %13 : vector<1x3x8x64xbf16> to vector<3x8x64xbf16>
    %15 = arith.extf %14 : vector<3x8x64xbf16> to vector<3x8x64xf32>
    %cst_13 = arith.constant dense<0.000000e+00> : vector<8x64xf32>
    %16 = vector.multi_reduction <add>, %15, %cst_13 [0] : vector<3x8x64xf32> to vector<8x64xf32>
    %17 = arith.truncf %16 : vector<8x64xf32> to vector<8x64xbf16>
    %c0_14 = arith.constant 0 : index
    %c0_15 = arith.constant 0 : index
    %18 = vector.load %arg7[%c0_14, %c0_15] : memref<64x32xbf16, #tpu.memory_space<vmem>>, vector<64x32xbf16>
    %cst_16 = arith.constant dense<0.000000e+00> : vector<8x32xf32>
    %19 = tpu.matmul %17, %18, %cst_16 {dimension_numbers = #tpu.dot_dimension_numbers<[1], [0], [0], [1], [0, 0, 1, 1], [], []>} : vector<8x64xbf16>, vector<64x32xbf16>, vector<8x32xf32> -> vector<8x32xf32>
    %20 = arith.addf %7, %19 : vector<8x32xf32>
    %21 = math.tanh %20 : vector<8x32xf32>
    %22 = arith.truncf %21 : vector<8x32xf32> to vector<8x32xbf16>
    %c0_17 = arith.constant 0 : index
    %c0_18 = arith.constant 0 : index
    %23 = vector.load %arg8[%c0_17, %c0_18] : memref<32x32xbf16, #tpu.memory_space<vmem>>, vector<32x32xbf16>
    %cst_19 = arith.constant dense<0.000000e+00> : vector<8x32xf32>
    %24 = tpu.matmul %22, %23, %cst_19 {dimension_numbers = #tpu.dot_dimension_numbers<[1], [0], [0], [1], [0, 0, 1, 1], [], []>} : vector<8x32xbf16>, vector<32x32xbf16>, vector<8x32xf32> -> vector<8x32xf32>
    %25 = arith.addf %12, %24 : vector<8x32xf32>
    %26 = arith.negf %25 : vector<8x32xf32>
    %27 = math.exp %26 : vector<8x32xf32>
    %cst_20 = arith.constant 1.000000e+00 : f32
    %28 = vector.broadcast %cst_20 : f32 to vector<8x32xf32>
    %29 = arith.addf %28, %27 : vector<8x32xf32>
    %30 = arith.divf %28, %29 : vector<8x32xf32>
    %31 = arith.extf %1 : vector<8x32xbf16> to vector<8x32xf32>
    %32 = arith.mulf %30, %31 : vector<8x32xf32>
    %cst_21 = arith.constant 1.000000e+00 : f32
    %33 = vector.broadcast %cst_21 : f32 to vector<8x32xf32>
    %34 = arith.subf %33, %30 : vector<8x32xf32>
    %35 = arith.mulf %34, %21 : vector<8x32xf32>
    %36 = arith.addf %32, %35 : vector<8x32xf32>
    %c0_22 = arith.constant 0 : index
    %c0_23 = arith.constant 0 : index
    %c0_24 = arith.constant 0 : index
    %37 = vector.load %arg9[%c0_22, %c0_23, %c0_24] : memref<1x8x32xf32, #tpu.memory_space<vmem>>, vector<1x8x32xf32>
    %38 = vector.shape_cast %37 : vector<1x8x32xf32> to vector<8x32xf32>
    %39 = vector.shape_cast %36 : vector<8x32xf32> to vector<1x8x32xf32>
    tpu.vector_store %arg9[%c0_22, %c0_23, %c0_24], %39 {strides = array<i32>} : memref<1x8x32xf32, #tpu.memory_space<vmem>>, vector<1x8x32xf32>,
    return
  }
  func.func @transform_0(%arg0: i32, %arg1: i32) -> (i32, i32, i32) {
    %c0_i32 = arith.constant 0 : i32
    %c0_i32_0 = arith.constant 0 : i32
    return %arg0, %arg1, %c0_i32 : i32, i32, i32
  }
  func.func @transform_1(%arg0: i32, %arg1: i32) -> (i32, i32, i32, i32) {
    %c0_i32 = arith.constant 0 : i32
    %c0_i32_0 = arith.constant 0 : i32
    %c0_i32_1 = arith.constant 0 : i32
    return %arg0, %c0_i32, %arg1, %c0_i32_0 : i32, i32, i32, i32
  }
  func.func @transform_2(%arg0: i32, %arg1: i32) -> (i32, i32, i32) {
    %c0_i32 = arith.constant 0 : i32
    %c0_i32_0 = arith.constant 0 : i32
    %c0_i32_1 = arith.constant 0 : i32
    return %arg0, %c0_i32, %c0_i32_0 : i32, i32, i32
  }
  func.func @transform_3(%arg0: i32, %arg1: i32) -> (i32, i32) {
    %c0_i32 = arith.constant 0 : i32
    %c0_i32_0 = arith.constant 0 : i32
    %c0_i32_1 = arith.constant 0 : i32
    return %c0_i32, %c0_i32_0 : i32, i32
  }
  func.func @transform_4(%arg0: i32, %arg1: i32) -> (i32, i32) {
    %c0_i32 = arith.constant 0 : i32
    %c0_i32_0 = arith.constant 0 : i32
    %c0_i32_1 = arith.constant 0 : i32
    return %c0_i32, %c0_i32_0 : i32, i32
  }
  func.func @transform_5(%arg0: i32, %arg1: i32) -> (i32, i32) {
    %c0_i32 = arith.constant 0 : i32
    %c0_i32_0 = arith.constant 0 : i32
    %c0_i32_1 = arith.constant 0 : i32
    return %c0_i32, %c0_i32_0 : i32, i32
  }
  func.func @transform_6(%arg0: i32, %arg1: i32) -> (i32, i32) {
    %c0_i32 = arith.constant 0 : i32
    %c0_i32_0 = arith.constant 0 : i32
    %c0_i32_1 = arith.constant 0 : i32
    return %c0_i32, %c0_i32_0 : i32, i32
  }
  func.func @transform_7(%arg0: i32, %arg1: i32) -> (i32, i32, i32) {
    %c0_i32 = arith.constant 0 : i32
    %c0_i32_0 = arith.constant 0 : i32
    return %arg0, %arg1, %c0_i32 : i32, i32, i32
  }
}

</mosaic_0001>

<llo_original>
// kernel: tpu_custom_call.1
$region0: #{tpu_custom_call.1}
  #allocation0 [shape = 'u32[]', space=smem, size = 0x4, offset = 0x4, fixed_abs, tag = 'smem constant byte address 0x4 - core index']
  #allocation1 [shape = 'u32[144,128]{1,0:T(1,128)}', space=vmem, size = 0x12000, scoped, tag = 'internal scratch']
  %s0 = inlined_call_operand.vmem [shape: bf16[2,8,32], index: 0, kind: input, shape index: {}]
  %s1 = inlined_call_operand.vmem [shape: bf16[2,3,8,64], index: 1, kind: input, shape index: {}]
  %s2 = inlined_call_operand.vmem [shape: f32[2,1,32], index: 2, kind: input, shape index: {}]
  %s3 = inlined_call_operand.vmem [shape: bf16[32,64], index: 3, kind: input, shape index: {}]
  %s4 = inlined_call_operand.hbm [shape: f32[1,32], index: 4, kind: input, shape index: {}]
  %s5 = inlined_call_operand.vmem [shape: bf16[64,32], index: 5, kind: input, shape index: {}]
  %s6 = inlined_call_operand.hbm [shape: bf16[32,32], index: 6, kind: input, shape index: {}]
  %s7 = inlined_call_operand.hbm [shape: f32[2,8,32], index: 7, kind: output, shape index: {}]
  %s8 = sld [smem:[#allocation0]]
  $region69: #{tpu_custom_call.1} parent=0
    _
  %s10 = ssub.s32 1, %s8
  %s11 = scalar_select 0, %s10, %s8
  $region1: #{tpu_custom_call.1} parent=0
    #allocation2 [shape = 'u8[512]{0}', space=vmem, size = 0x400, scoped, tag = 'input window, operand 4, single buffered']
    #allocation3 [shape = 's32[2]{0}', space=sflag, size = 0x8, scoped, tag = 'scoped memory for tpu_custom_call.1']
    #allocation4 [shape = 's32[2]{0}', space=sflag, size = 0x8, scoped, tag = 'scoped memory for tpu_custom_call.1']
    #allocation5 [shape = 'u8[8192]{0}', space=vmem, size = 0x2000, scoped, tag = 'input window, operand 6, single buffered']
    #allocation6 [shape = 's32[1]{0}', space=sflag, size = 0x4, scoped, tag = 'scoped memory for tpu_custom_call.1']
    #allocation7 [shape = 'u8[8192]{0}', space=vmem, size = 0x2000, scoped, tag = 'output window, operand 0']
    %12 = vsyncpa [#allocation3], 0
    %13 = vsyncpa [#allocation6], 0
    %14 = vsyncpa [#allocation4], 0
    %s15 = scalar_lea.sflag [#allocation4], 1
    %16 = vsyncpa %s15, 0
    loop: start=0, step=1, limit=4
    $region2: #{tpu_custom_call.1} parent=1 // loop_pre_header
      _
    $region3: #{tpu_custom_call.1} parent=1 // loop_header
      %s18 = sphi 0, %s22
      %p19 = scmp.ge.s32.totalorder %s18, 4
      %s25 = sphi 0, %s37
      %s26 = sphi 0, %s33
      %s27 = sphi 0, %s25
      %s28 = sphi 0, %s26
      %s29 = sphi 0, %s27
      %s30 = sphi 0, %s28
      %s42 = sphi 0, %s44
      %s45 = sphi 0, %s42
      %s46 = sphi 0, %s45
      %s62 = sphi 0, %s46
      %s70 = sphi 0, %s72
      %s73 = sphi 0, %s70
      %s74 = sphi 0, %s73
      %s90 = sphi 0, %s74
      %s96 = sphi 0, %s98
      %s99 = sphi 0, %s96
      %s100 = sphi 0, %s99
      %s116 = sphi 0, %s100
      %s120 = sphi 0, %s120
      %s122 = sphi 0, %s120
      %s123 = sphi 0, %s122
      %s137 = sphi 0, %s123
      %s141 = sphi 0, %s141
      %s143 = sphi 0, %s141
      %s144 = sphi 0, %s143
      %s158 = sphi 0, %s144
      %s162 = sphi 0, %s162
      %s164 = sphi 0, %s162
      %s165 = sphi 0, %s164
      %s179 = sphi 0, %s165
      %s183 = sphi 0, %s183
      %s185 = sphi 0, %s183
      %s186 = sphi 0, %s185
      %s200 = sphi 0, %s186
      %s208 = sphi 0, %s210
      %s211 = sphi 0, %s208
      %s212 = sphi 0, %s211
      %s228 = sphi 0, %s212
    $region4: #{tpu_custom_call.1} parent=1 // loop_header_branch
      %21 = sbr.rel (%p19) target = $region8
    $region5: #{tpu_custom_call.1} parent=1 // loop_body
      %s23 = ssub.s32 %s18, 1
      %s24 = ssub.s32 %s18, 2
      %s31 = sadd.s32 1, %s26
      %p32 = scmp.ge.s32.totalorder %s31, 1
      %s33 = scalar_select %p32, 0, %s31
      %s34 = sadd.s32 1, %s25
      %s35 = scalar_select %p32, %s34, %s25
      %p36 = scmp.ge.s32.totalorder %s35, 2
      %s37 = scalar_select %p36, 0, %s35
      %s38 = ssub.s32 %s25, %s37
      %s39 = ssub.s32 %s26, %s33
      %s40 = sor.u32 %s38, %s39
      %p41 = scmp.eq.s32.totalorder %s40, 0
      %s43 = sadd.s32 %s42, 1
      %s44 = scalar_select %p41, %s42, %s43
      %p47 = pneg %p41
      %p48 = scmp.eq.s32.totalorder %s18, 1
      %p49 = por %p47, %p48
      %p50 = scmp.ne.s32.totalorder %s42, %s45
      %p51 = scmp.eq.s32.totalorder %s18, 0
      %p52 = por %p50, %p51
      %p53 = scmp.ne.s32.totalorder %s42, %s45
      %p54 = scmp.eq.s32.totalorder %s23, 1
      %p55 = por %p53, %p54
      %p56 = scmp.ne.s32.totalorder %s45, %s46
      %p57 = scmp.eq.s32.totalorder %s23, 0
      %p58 = por %p56, %p57
      %p59 = scmp.ne.s32.totalorder %s45, %s46
      %p60 = scmp.eq.s32.totalorder %s24, 1
      %p61 = por %p59, %p60
      %p63 = scmp.ne.s32.totalorder %s46, %s62
      %p64 = scmp.eq.s32.totalorder %s24, 0
      %p65 = por %p63, %p64
      %s66 = ssub.s32 %s25, %s37
      %s67 = ssub.s32 %s26, %s33
      %s68 = sor.u32 %s66, %s67
      %p69 = scmp.eq.s32.totalorder %s68, 0
      %s71 = sadd.s32 %s70, 1
      %s72 = scalar_select %p69, %s70, %s71
      %p75 = pneg %p69
      %p76 = scmp.eq.s32.totalorder %s18, 1
      %p77 = por %p75, %p76
      %p78 = scmp.ne.s32.totalorder %s70, %s73
      %p79 = scmp.eq.s32.totalorder %s18, 0
      %p80 = por %p78, %p79
      %p81 = scmp.ne.s32.totalorder %s70, %s73
      %p82 = scmp.eq.s32.totalorder %s23, 1
      %p83 = por %p81, %p82
      %p84 = scmp.ne.s32.totalorder %s73, %s74
      %p85 = scmp.eq.s32.totalorder %s23, 0
      %p86 = por %p84, %p85
      %p87 = scmp.ne.s32.totalorder %s73, %s74
      %p88 = scmp.eq.s32.totalorder %s24, 1
      %p89 = por %p87, %p88
      %p91 = scmp.ne.s32.totalorder %s74, %s90
      %p92 = scmp.eq.s32.totalorder %s24, 0
      %p93 = por %p91, %p92
      %s94 = ssub.s32 %s25, %s37
      %p95 = scmp.eq.s32.totalorder %s94, 0
      %s97 = sadd.s32 %s96, 1
      %s98 = scalar_select %p95, %s96, %s97
      %p101 = pneg %p95
      %p102 = scmp.eq.s32.totalorder %s18, 1
      %p103 = por %p101, %p102
      %p104 = scmp.ne.s32.totalorder %s96, %s99
      %p105 = scmp.eq.s32.totalorder %s18, 0
      %p106 = por %p104, %p105
      %p107 = scmp.ne.s32.totalorder %s96, %s99
      %p108 = scmp.eq.s32.totalorder %s23, 1
      %p109 = por %p107, %p108
      %p110 = scmp.ne.s32.totalorder %s99, %s100
      %p111 = scmp.eq.s32.totalorder %s23, 0
      %p112 = por %p110, %p111
      %p113 = scmp.ne.s32.totalorder %s99, %s100
      %p114 = scmp.eq.s32.totalorder %s24, 1
      %p115 = por %p113, %p114
      %p117 = scmp.ne.s32.totalorder %s100, %s116
      %p118 = scmp.eq.s32.totalorder %s24, 0
      %p119 = por %p117, %p118
      %s121 = sadd.s32 %s120, 1
      %p124 = scmp.eq.s32.totalorder %s18, 1
      %p125 = scmp.ne.s32.totalorder %s120, %s122
      %p126 = scmp.eq.s32.totalorder %s18, 0
      %p127 = por %p125, %p126
      %p128 = scmp.ne.s32.totalorder %s120, %s122
      %p129 = scmp.eq.s32.totalorder %s23, 1
      %p130 = por %p128, %p129
      %p131 = scmp.ne.s32.totalorder %s122, %s123
      %p132 = scmp.eq.s32.totalorder %s23, 0
      %p133 = por %p131, %p132
      %p134 = scmp.ne.s32.totalorder %s122, %s123
      %p135 = scmp.eq.s32.totalorder %s24, 1
      %p136 = por %p134, %p135
      %p138 = scmp.ne.s32.totalorder %s123, %s137
      %p139 = scmp.eq.s32.totalorder %s24, 0
      %p140 = por %p138, %p139
      %s142 = sadd.s32 %s141, 1
      %p145 = scmp.eq.s32.totalorder %s18, 1
      %p146 = scmp.ne.s32.totalorder %s141, %s143
      %p147 = scmp.eq.s32.totalorder %s18, 0
      %p148 = por %p146, %p147
      %p149 = scmp.ne.s32.totalorder %s141, %s143
      %p150 = scmp.eq.s32.totalorder %s23, 1
      %p151 = por %p149, %p150
      %p152 = scmp.ne.s32.totalorder %s143, %s144
      %p153 = scmp.eq.s32.totalorder %s23, 0
      %p154 = por %p152, %p153
      %p155 = scmp.ne.s32.totalorder %s143, %s144
      %p156 = scmp.eq.s32.totalorder %s24, 1
      %p157 = por %p155, %p156
      %p159 = scmp.ne.s32.totalorder %s144, %s158
      %p160 = scmp.eq.s32.totalorder %s24, 0
      %p161 = por %p159, %p160
      %s163 = sadd.s32 %s162, 1
      %p166 = scmp.eq.s32.totalorder %s18, 1
      %p167 = scmp.ne.s32.totalorder %s162, %s164
      %p168 = scmp.eq.s32.totalorder %s18, 0
      %p169 = por %p167, %p168
      %p170 = scmp.ne.s32.totalorder %s162, %s164
      %p171 = scmp.eq.s32.totalorder %s23, 1
      %p172 = por %p170, %p171
      %p173 = scmp.ne.s32.totalorder %s164, %s165
      %p174 = scmp.eq.s32.totalorder %s23, 0
      %p175 = por %p173, %p174
      %p176 = scmp.ne.s32.totalorder %s164, %s165
      %p177 = scmp.eq.s32.totalorder %s24, 1
      %p178 = por %p176, %p177
      %p180 = scmp.ne.s32.totalorder %s165, %s179
      %p181 = scmp.eq.s32.totalorder %s24, 0
      %p182 = por %p180, %p181
      %s184 = sadd.s32 %s183, 1
      %p187 = scmp.eq.s32.totalorder %s18, 1
      %p188 = scmp.ne.s32.totalorder %s183, %s185
      %p189 = scmp.eq.s32.totalorder %s18, 0
      %p190 = por %p188, %p189
      %p191 = scmp.ne.s32.totalorder %s183, %s185
      %p192 = scmp.eq.s32.totalorder %s23, 1
      %p193 = por %p191, %p192
      %p194 = scmp.ne.s32.totalorder %s185, %s186
      %p195 = scmp.eq.s32.totalorder %s23, 0
      %p196 = por %p194, %p195
      %p197 = scmp.ne.s32.totalorder %s185, %s186
      %p198 = scmp.eq.s32.totalorder %s24, 1
      %p199 = por %p197, %p198
      %p201 = scmp.ne.s32.totalorder %s186, %s200
      %p202 = scmp.eq.s32.totalorder %s24, 0
      %p203 = por %p201, %p202
      %s204 = ssub.s32 %s25, %s37
      %s205 = ssub.s32 %s26, %s33
      %s206 = sor.u32 %s204, %s205
      %p207 = scmp.eq.s32.totalorder %s206, 0
      %s209 = sadd.s32 %s208, 1
      %s210 = scalar_select %p207, %s208, %s209
      %p213 = pneg %p207
      %p214 = scmp.eq.s32.totalorder %s18, 1
      %p215 = por %p213, %p214
      %p216 = scmp.ne.s32.totalorder %s208, %s211
      %p217 = scmp.eq.s32.totalorder %s18, 0
      %p218 = por %p216, %p217
      %p219 = scmp.ne.s32.totalorder %s208, %s211
      %p220 = scmp.eq.s32.totalorder %s23, 1
      %p221 = por %p219, %p220
      %p222 = scmp.ne.s32.totalorder %s211, %s212
      %p223 = scmp.eq.s32.totalorder %s23, 0
      %p224 = por %p222, %p223
      %p225 = scmp.ne.s32.totalorder %s211, %s212
      %p226 = scmp.eq.s32.totalorder %s24, 1
      %p227 = por %p225, %p226
      %p229 = scmp.ne.s32.totalorder %s212, %s228
      %p230 = scmp.eq.s32.totalorder %s24, 0
      %p231 = por %p229, %p230
      %p232 = scmp.le.s32.totalorder 1, %s18
      %p233 = scmp.lt.s32.totalorder %s18, 3
      %p234 = pnand %p232, %p233
      %p235 = pneg %p234
      // Predicated region
      $region9: #{tpu_custom_call.1} parent=5 // pred_check
        _
      $region10: #{tpu_custom_call.1} parent=5 // pred_check_branch
        %237 = sbr.rel (%p234) target = $region12
      $region11: #{tpu_custom_call.1} parent=5 // pred_region
        %s238 = ssub.s32 %s18, 1
        // Predicated region
        $region13: #{tpu_custom_call.1} parent=11 // pred_check
          %p239 = pneg %p133
        $region14: #{tpu_custom_call.1} parent=11 // pred_check_branch
          %241 = sbr.rel (%p239) target = $region16
        $region15: #{tpu_custom_call.1} parent=11 // pred_region
          _
        $region16: #{tpu_custom_call.1} parent=11 // pred_fallthru
          _
        // Predicated region
        $region17: #{tpu_custom_call.1} parent=11 // pred_check
          %p242 = pneg %p154
        $region18: #{tpu_custom_call.1} parent=11 // pred_check_branch
          %244 = sbr.rel (%p242) target = $region20
        $region19: #{tpu_custom_call.1} parent=11 // pred_region
          %s246 = ssub.s32 16, 16
          %247 = vsyncadd [#allocation3], %s246
          %s249 = sshll.u32 [#allocation2], 4
          %s250 = int_to_ptr.vmem [resolvable:$true] %s249
          %252 = dma.hbm_to_vmem [thread:$0]  %s4, 16, %s250, [#allocation3]
        $region20: #{tpu_custom_call.1} parent=11 // pred_fallthru
          _
        // Predicated region
        $region21: #{tpu_custom_call.1} parent=11 // pred_check
          %p253 = pneg %p175
        $region22: #{tpu_custom_call.1} parent=11 // pred_check_branch
          %255 = sbr.rel (%p253) target = $region24
        $region23: #{tpu_custom_call.1} parent=11 // pred_region
          _
        $region24: #{tpu_custom_call.1} parent=11 // pred_fallthru
          _
        // Predicated region
        $region25: #{tpu_custom_call.1} parent=11 // pred_check
          %p256 = pneg %p196
        $region26: #{tpu_custom_call.1} parent=11 // pred_check_branch
          %258 = sbr.rel (%p256) target = $region28
        $region27: #{tpu_custom_call.1} parent=11 // pred_region
          %s260 = ssub.s32 256, 256
          %261 = vsyncadd [#allocation6], %s260
          %s262 = sshll.u32 [#allocation5], 4
          %s263 = int_to_ptr.vmem [resolvable:$true] %s262
          %268 = dma.hbm_to_vmem [thread:$0]  %s6, 256, %s263, [#allocation6], 64, 64, 4
        $region28: #{tpu_custom_call.1} parent=11 // pred_fallthru
          _
      $region12: #{tpu_custom_call.1} parent=5 // pred_fallthru
        _
      %p269 = scmp.lt.s32.totalorder %s18, 2
      // Predicated region
      $region29: #{tpu_custom_call.1} parent=5 // pred_check
        %p270 = pneg %p269
      $region30: #{tpu_custom_call.1} parent=5 // pred_check_branch
        %272 = sbr.rel (%p270) target = $region32
      $region31: #{tpu_custom_call.1} parent=5 // pred_region
        // Predicated region
        $region33: #{tpu_custom_call.1} parent=31 // pred_check
          %p273 = pneg %p52
        $region34: #{tpu_custom_call.1} parent=31 // pred_check_branch
          %275 = sbr.rel (%p273) target = $region36
        $region35: #{tpu_custom_call.1} parent=31 // pred_region
          %p276 = scmp.lt.s32.totalorder %s25, 1
          %s277 = scalar_select %p276, %s25, 1
          %p278 = scmp.lt.s32.totalorder %s26, 0
          %s279 = scalar_select %p278, %s26, 0
          %s280 = sadd.s32 %s279, %s277
          %s281 = smul.addr %s280, 4
          %s282 = scalar_lea.vmem %s0, %s281
        $region36: #{tpu_custom_call.1} parent=31 // pred_fallthru
          _
        // Predicated region
        $region37: #{tpu_custom_call.1} parent=31 // pred_check
          %p283 = pneg %p80
        $region38: #{tpu_custom_call.1} parent=31 // pred_check_branch
          %285 = sbr.rel (%p283) target = $region40
        $region39: #{tpu_custom_call.1} parent=31 // pred_region
          %p286 = scmp.lt.s32.totalorder %s25, 1
          %s287 = scalar_select %p286, %s25, 1
          %p288 = scmp.lt.s32.totalorder %s26, 0
          %s289 = scalar_select %p288, %s26, 0
          %s290 = smul.addr %s287, 3
          %s291 = sadd.s32 %s289, %s290
          %s292 = smul.addr %s291, 4
          %s293 = scalar_lea.vmem %s1, %s292
        $region40: #{tpu_custom_call.1} parent=31 // pred_fallthru
          _
        // Predicated region
        $region41: #{tpu_custom_call.1} parent=31 // pred_check
          %p294 = pneg %p106
        $region42: #{tpu_custom_call.1} parent=31 // pred_check_branch
          %296 = sbr.rel (%p294) target = $region44
        $region43: #{tpu_custom_call.1} parent=31 // pred_region
          %p297 = scmp.lt.s32.totalorder %s25, 1
          %s298 = scalar_select %p297, %s25, 1
          %s299 = scalar_lea.vmem %s2, %s298
        $region44: #{tpu_custom_call.1} parent=31 // pred_fallthru
          _
      $region32: #{tpu_custom_call.1} parent=5 // pred_fallthru
        _
      %p300 = scmp.le.s32.totalorder 1, %s18
      %p301 = scmp.lt.s32.totalorder %s18, 3
      %p302 = pnand %p300, %p301
      %p303 = pneg %p302
      // Predicated region
      $region45: #{tpu_custom_call.1} parent=5 // pred_check
        _
      $region46: #{tpu_custom_call.1} parent=5 // pred_check_branch
        %305 = sbr.rel (%p302) target = $region48
      $region47: #{tpu_custom_call.1} parent=5 // pred_region
        %s306 = ssub.s32 %s18, 1
        // Predicated region
        $region49: #{tpu_custom_call.1} parent=47 // pred_check
          %p307 = pneg %p154
        $region50: #{tpu_custom_call.1} parent=47 // pred_check_branch
          %309 = sbr.rel (%p307) target = $region52
        $region51: #{tpu_custom_call.1} parent=47 // pred_region
          %310 = dma.done [#allocation3], 16
        $region52: #{tpu_custom_call.1} parent=47 // pred_fallthru
          _
        // Predicated region
        $region53: #{tpu_custom_call.1} parent=47 // pred_check
          %p311 = pneg %p196
        $region54: #{tpu_custom_call.1} parent=47 // pred_check_branch
          %313 = sbr.rel (%p311) target = $region56
        $region55: #{tpu_custom_call.1} parent=47 // pred_region
          %314 = dma.done [#allocation6], 256
        $region56: #{tpu_custom_call.1} parent=47 // pred_fallthru
          _
        %p315 = scmp.lt.s32.totalorder %s27, 1
        %s316 = scalar_select %p315, %s27, 1
        %p317 = scmp.lt.s32.totalorder %s28, 0
        %s318 = scalar_select %p317, %s28, 0
        %s319 = sadd.s32 %s318, %s316
        %s320 = smul.addr %s319, 4
        %s321 = scalar_lea.vmem %s0, %s320
        %p322 = pneg %p58
        %p323 = pneg %p55
        %p324 = scmp.lt.s32.totalorder %s27, 1
        %s325 = scalar_select %p324, %s27, 1
        %p326 = scmp.lt.s32.totalorder %s28, 0
        %s327 = scalar_select %p326, %s28, 0
        %s328 = smul.addr %s325, 3
        %s329 = sadd.s32 %s327, %s328
        %s330 = smul.addr %s329, 4
        %s331 = scalar_lea.vmem %s1, %s330
        %p332 = pneg %p86
        %p333 = pneg %p83
        %p334 = scmp.lt.s32.totalorder %s27, 1
        %s335 = scalar_select %p334, %s27, 1
        %s336 = scalar_lea.vmem %s2, %s335
        %p337 = pneg %p112
        %p338 = pneg %p109
        %p339 = pneg %p133
        %p340 = pneg %p130
        %p341 = pneg %p154
        %p342 = pneg %p151
        %p343 = pneg %p175
        %p344 = pneg %p172
        %p345 = pneg %p196
        %p346 = pneg %p193
        %p347 = pneg %p224
        %p348 = pneg %p221
        %s349 = sand.u32 %s211, 1
        %s350 = scalar_lea.sflag [#allocation4], %s349
        %s351 = sand.u32 %s211, 1
        %s352 = smul.addr %s351, 8
        %s353 = scalar_lea.vmem [#allocation7], %s352
        %p354 = scmp.lt.s32.totalorder %s27, 1
        %s355 = scalar_select %p354, %s27, 1
        %p356 = scmp.lt.s32.totalorder %s28, 0
        %s357 = scalar_select %p356, %s28, 0
        %s358 = sadd.s32 %s357, %s355
        %s359 = smul.addr %s358, 4
        %s360 = scalar_lea.vmem %s0, %s359
        %p361 = scmp.lt.s32.totalorder %s27, 1
        %s362 = scalar_select %p361, %s27, 1
        %p363 = scmp.lt.s32.totalorder %s28, 0
        %s364 = scalar_select %p363, %s28, 0
        %s365 = smul.addr %s362, 3
        %s366 = sadd.s32 %s364, %s365
        %s367 = smul.addr %s366, 4
        %s368 = scalar_lea.vmem %s1, %s367
        %p369 = scmp.lt.s32.totalorder %s27, 1
        %s370 = scalar_select %p369, %s27, 1
        %s371 = scalar_lea.vmem %s2, %s370
        %v373 = vld [vmem:[%s360] sm:$0xf]
        %v374 = vld [vmem:[%s3] sm:$0xf]
        %v375 = vld [vmem:[%s3 + $0x4] sm:$0xf]
        %v376 = vld [vmem:[%s3 + $0x8] sm:$0xf]
        %v377 = vld [vmem:[%s3 + $0xc] sm:$0xf]
        %v382 = vunpack.c.l.b16 %v374
        %v383 = vunpack.c.l.b16 %v375
        %v384 = vunpack.c.l.b16 %v376
        %v385 = vunpack.c.l.b16 %v377
        %v386 = vpack.c.b16 %v383, %v382
        %v387 = vpack.c.b16 %v385, %v384
        %vm390 = vcmask 261120
        %v392 = vsel %vm390, %v373, 0
        %394 = vmatprep.subr.bf16.mxu0 0
        %395 = vmatpush1.bf16.msra.mxu0 %v386
        %396 = vmatprep.subr.bf16.mxu0 0
        %397 = vmatpush1.bf16.msra.mxu0 %v387
        %398 = vmatprep.subr.bf16.mxu0 0
        %399 = vmatpush1.bf16.msra.mxu0 0
        %400 = vmatprep.subr.bf16.mxu0 0
        %401 = vmatpush1.bf16.msra.mxu0 0
        %402 = vmatprep.subr.bf16.mxu0 0
        %403 = vmatpush1.bf16.msra.mxu0 0
        %404 = vmatprep.subr.bf16.mxu0 0
        %405 = vmatpush1.bf16.msra.mxu0 0
        %406 = vmatprep.subr.bf16.mxu0 0
        %407 = vmatpush1.bf16.msra.mxu0 0
        %408 = vmatprep.subr.bf16.mxu0 0
        %409 = vmatpush1.bf16.msra.mxu0 0
        %410 = vmatprep.subr.bf16.mxu0 0
        %411 = vmatpush1.bf16.msra.mxu0 0
        %412 = vmatprep.subr.bf16.mxu0 0
        %413 = vmatpush1.bf16.msra.mxu0 0
        %414 = vmatprep.subr.bf16.mxu0 0
        %415 = vmatpush1.bf16.msra.mxu0 0
        %416 = vmatprep.subr.bf16.mxu0 0
        %417 = vmatpush1.bf16.msra.mxu0 0
        %418 = vmatprep.subr.bf16.mxu0 0
        %419 = vmatpush1.bf16.msra.mxu0 0
        %420 = vmatprep.subr.bf16.mxu0 0
        %421 = vmatpush1.bf16.msra.mxu0 0
        %422 = vmatprep.subr.bf16.mxu0 0
        %423 = vmatpush1.bf16.msra.mxu0 0
        %424 = vmatprep.subr.bf16.mxu0 0
        %425 = vmatpush1.bf16.msra.mxu0 0
        %426 = vmatprep.mubr.bf16.mxu0 0
        %427 = vmatmul.mubr.bf16.gmra.mrb[0].mxu0 %v392
        %v428 = vpop.f32.mrb[0].mxu0
        %v429 = vadd.f32 0.0, %v428
        %v430 = vpop.f32.mrb[0].mxu0
        %v431 = vpop.f32.mrb[0].mxu0
        %v432 = vpop.f32.mrb[0].mxu0
        %433 = vdwg.mxu0
        %v434 = vld [vmem:[#allocation2] sm:$0x1]
        %v436 = vlaneseq
        %v437 = vshrl.u32 %v436, 7
        %v438 = vsub.s32 0, %v437
        %v439 = vrot.slane %v434, %v438
        %v441 = vadd.f32 %v429, %v439
        %v442 = vld [vmem:[%s371] sm:$0x1]
        %v444 = vlaneseq
        %v445 = vshrl.u32 %v444, 7
        %v446 = vsub.s32 0, %v445
        %v447 = vrot.slane %v442, %v446
        %448 = vrot.lane.b32.xlu0 %v447, 32
        %v449 = vpop.permute.xlu0 %448
        %v451 = vadd.f32 %v429, %v449
        %v452 = vld [vmem:[%s368] sm:$0xf]
        %v453 = vld [vmem:[%s368 + $0x4] sm:$0xf]
        %v454 = vld [vmem:[%s368 + $0x8] sm:$0xf]
        %v455 = vunpack.c.l.bf16 %v452
        %v456 = vunpack.c.l.bf16 %v453
        %v457 = vunpack.c.l.bf16 %v454
        %vm458 = vcmask 523264
        %v459 = vsel %vm458, %v455, 0.0
        %v460 = vsel %vm458, %v456, 0.0
        %v461 = vadd.f32 %v459, %v460
        %v462 = vsel %vm458, %v457, 0.0
        %v463 = vadd.f32 %v461, %v462
        %v464 = vpack.c.bf16 %v463, %v463
        %v465 = vld [vmem:[%s5] sm:$0xf]
        %v466 = vld [vmem:[%s5 + $0x4] sm:$0xf]
        %v467 = vld [vmem:[%s5 + $0x8] sm:$0xf]
        %v468 = vld [vmem:[%s5 + $0xc] sm:$0xf]
        %v469 = vld [vmem:[%s5 + $0x10] sm:$0xf]
        %v470 = vld [vmem:[%s5 + $0x14] sm:$0xf]
        %v471 = vld [vmem:[%s5 + $0x18] sm:$0xf]
        %v472 = vld [vmem:[%s5 + $0x1c] sm:$0xf]
        %v481 = vunpack.c.l.b16 %v465
        %v482 = vunpack.c.l.b16 %v466
        %v483 = vunpack.c.l.b16 %v467
        %v484 = vunpack.c.l.b16 %v468
        %v485 = vunpack.c.l.b16 %v469
        %v486 = vunpack.c.l.b16 %v470
        %v487 = vunpack.c.l.b16 %v471
        %v488 = vunpack.c.l.b16 %v472
        %v489 = vpack.c.b16 %v482, %v481
        %v490 = vpack.c.b16 %v484, %v483
        %v491 = vpack.c.b16 %v486, %v485
        %v492 = vpack.c.b16 %v488, %v487
        %v498 = vsel %vm458, %v464, 0
        %500 = vmatprep.subr.bf16.mxu0 0
        %501 = vmatpush1.bf16.msra.mxu0 %v489
        %502 = vmatprep.subr.bf16.mxu0 0
        %503 = vmatpush1.bf16.msra.mxu0 %v490
        %504 = vmatprep.subr.bf16.mxu0 0
        %505 = vmatpush1.bf16.msra.mxu0 %v491
        %506 = vmatprep.subr.bf16.mxu0 0
        %507 = vmatpush1.bf16.msra.mxu0 %v492
        %508 = vmatprep.subr.bf16.mxu0 0
        %509 = vmatpush1.bf16.msra.mxu0 0
        %510 = vmatprep.subr.bf16.mxu0 0
        %511 = vmatpush1.bf16.msra.mxu0 0
        %512 = vmatprep.subr.bf16.mxu0 0
        %513 = vmatpush1.bf16.msra.mxu0 0
        %514 = vmatprep.subr.bf16.mxu0 0
        %515 = vmatpush1.bf16.msra.mxu0 0
        %516 = vmatprep.subr.bf16.mxu0 0
        %517 = vmatpush1.bf16.msra.mxu0 0
        %518 = vmatprep.subr.bf16.mxu0 0
        %519 = vmatpush1.bf16.msra.mxu0 0
        %520 = vmatprep.subr.bf16.mxu0 0
        %521 = vmatpush1.bf16.msra.mxu0 0
        %522 = vmatprep.subr.bf16.mxu0 0
        %523 = vmatpush1.bf16.msra.mxu0 0
        %524 = vmatprep.subr.bf16.mxu0 0
        %525 = vmatpush1.bf16.msra.mxu0 0
        %526 = vmatprep.subr.bf16.mxu0 0
        %527 = vmatpush1.bf16.msra.mxu0 0
        %528 = vmatprep.subr.bf16.mxu0 0
        %529 = vmatpush1.bf16.msra.mxu0 0
        %530 = vmatprep.subr.bf16.mxu0 0
        %531 = vmatpush1.bf16.msra.mxu0 0
        %532 = vmatprep.mubr.bf16.mxu0 0
        %533 = vmatmul.mubr.bf16.gmra.mrb[0].mxu0 %v498
        %v534 = vpop.f32.mrb[0].mxu0
        %v535 = vadd.f32 0.0, %v534
        %v536 = vpop.f32.mrb[0].mxu0
        %v537 = vpop.f32.mrb[0].mxu0
        %v538 = vpop.f32.mrb[0].mxu0
        %539 = vdwg.mxu0
        %v540 = vadd.f32 %v441, %v535
        %v541 = vtanh.pop %v540
        %v542 = vpack.c.bf16 %v541, %v541
        %v543 = vld [vmem:[#allocation5] sm:$0xf]
        %v544 = vld [vmem:[#allocation5 + $0x4] sm:$0xf]
        %v545 = vld [vmem:[#allocation5 + $0x8] sm:$0xf]
        %v546 = vld [vmem:[#allocation5 + $0xc] sm:$0xf]
        %v551 = vunpack.c.l.b16 %v543
        %v552 = vunpack.c.l.b16 %v544
        %v553 = vunpack.c.l.b16 %v545
        %v554 = vunpack.c.l.b16 %v546
        %v555 = vpack.c.b16 %v552, %v551
        %v556 = vpack.c.b16 %v554, %v553
        %v560 = vsel %vm390, %v542, 0
        %562 = vmatprep.subr.bf16.mxu0 0
        %563 = vmatpush1.bf16.msra.mxu0 %v555
        %564 = vmatprep.subr.bf16.mxu0 0
        %565 = vmatpush1.bf16.msra.mxu0 %v556
        %566 = vmatprep.subr.bf16.mxu0 0
        %567 = vmatpush1.bf16.msra.mxu0 0
        %568 = vmatprep.subr.bf16.mxu0 0
        %569 = vmatpush1.bf16.msra.mxu0 0
        %570 = vmatprep.subr.bf16.mxu0 0
        %571 = vmatpush1.bf16.msra.mxu0 0
        %572 = vmatprep.subr.bf16.mxu0 0
        %573 = vmatpush1.bf16.msra.mxu0 0
        %574 = vmatprep.subr.bf16.mxu0 0
        %575 = vmatpush1.bf16.msra.mxu0 0
        %576 = vmatprep.subr.bf16.mxu0 0
        %577 = vmatpush1.bf16.msra.mxu0 0
        %578 = vmatprep.subr.bf16.mxu0 0
        %579 = vmatpush1.bf16.msra.mxu0 0
        %580 = vmatprep.subr.bf16.mxu0 0
        %581 = vmatpush1.bf16.msra.mxu0 0
        %582 = vmatprep.subr.bf16.mxu0 0
        %583 = vmatpush1.bf16.msra.mxu0 0
        %584 = vmatprep.subr.bf16.mxu0 0
        %585 = vmatpush1.bf16.msra.mxu0 0
        %586 = vmatprep.subr.bf16.mxu0 0
        %587 = vmatpush1.bf16.msra.mxu0 0
        %588 = vmatprep.subr.bf16.mxu0 0
        %589 = vmatpush1.bf16.msra.mxu0 0
        %590 = vmatprep.subr.bf16.mxu0 0
        %591 = vmatpush1.bf16.msra.mxu0 0
        %592 = vmatprep.subr.bf16.mxu0 0
        %593 = vmatpush1.bf16.msra.mxu0 0
        %594 = vmatprep.mubr.bf16.mxu0 0
        %595 = vmatmul.mubr.bf16.gmra.mrb[0].mxu0 %v560
        %v596 = vpop.f32.mrb[0].mxu0
        %v597 = vadd.f32 0.0, %v596
        %v598 = vpop.f32.mrb[0].mxu0
        %v599 = vpop.f32.mrb[0].mxu0
        %v600 = vpop.f32.mrb[0].mxu0
        %601 = vdwg.mxu0
        %603 = vrot.lane.b32.xlu0 %v597, 32
        %v604 = vpop.permute.xlu0 %603
        %v606 = vadd.f32 %v451, %v604
        %v607 = vxor.u32 %v606, 2147483648
        %v608 = vmul.f32 %v607, 1.442695
        %v609 = vpow.pop %v608
        %v610 = vadd.f32 %v609, 1.0
        %v611 = vrcp.pop %v610
        %v612 = vmul.f32 1.0, %v611
        %v613 = vunpack.c.l.bf16 %v373
        %615 = vrot.lane.b32.xlu0 %v613, 32
        %v616 = vpop.permute.xlu0 %615
        %v618 = vmul.f32 %v612, %v616
        %v619 = vsub.f32 1.0, %v612
        %621 = vrot.lane.b32.xlu0 %v541, 32
        %v622 = vpop.permute.xlu0 %621
        %v624 = vmul.f32 %v619, %v622
        %v625 = vadd.f32 %v618, %v624
        %627 = vrot.lane.b32.xlu0 %v625, 96
        %v628 = vpop.permute.xlu0 %627
        %630 = vst.msk [vmem:[%s353] sm:$0xff] %vm390, %v628
        %s631 = sand.u32 %s211, 1
        %s632 = scalar_lea.sflag [#allocation4], %s631
        %s633 = sand.u32 %s211, 1
        %s634 = smul.addr %s633, 8
        %s635 = scalar_lea.vmem [#allocation7], %s634
        // Predicated region
        $region57: #{tpu_custom_call.1} parent=47 // pred_check
          %p636 = pneg %p221
        $region58: #{tpu_custom_call.1} parent=47 // pred_check_branch
          %638 = sbr.rel (%p636) target = $region60
        $region59: #{tpu_custom_call.1} parent=47 // pred_region
          %s640 = ssub.s32 128, 128
          %641 = vsyncadd %s632, %s640
          %s642 = sadd.s32 %s28, %s27
          %s643 = smul.addr %s642, 128
          %s644 = scalar_lea.hbm %s7, %s643
          %s646 = sshll.u32 %s635, 4
          %s647 = int_to_ptr.vmem [resolvable:$true] %s646
          %649 = dma.vmem_to_hbm [thread:$0]  %s647, 128, %s644, %s632
        $region60: #{tpu_custom_call.1} parent=47 // pred_fallthru
          _
      $region48: #{tpu_custom_call.1} parent=5 // pred_fallthru
        _
      %p650 = scmp.le.s32.totalorder 2, %s18
      // Predicated region
      $region61: #{tpu_custom_call.1} parent=5 // pred_check
        %p651 = pneg %p650
      $region62: #{tpu_custom_call.1} parent=5 // pred_check_branch
        %653 = sbr.rel (%p651) target = $region64
      $region63: #{tpu_custom_call.1} parent=5 // pred_region
        %s654 = ssub.s32 %s18, 2
        // Predicated region
        $region65: #{tpu_custom_call.1} parent=63 // pred_check
          %p655 = pneg %p227
        $region66: #{tpu_custom_call.1} parent=63 // pred_check_branch
          %657 = sbr.rel (%p655) target = $region68
        $region67: #{tpu_custom_call.1} parent=63 // pred_region
          %s658 = sand.u32 %s212, 1
          %s659 = scalar_lea.sflag [#allocation4], %s658
          %s660 = sand.u32 %s212, 1
          %s661 = smul.addr %s660, 8
          %s662 = scalar_lea.vmem [#allocation7], %s661
          %663 = dma.done %s659, 128
        $region68: #{tpu_custom_call.1} parent=63 // pred_fallthru
          _
      $region64: #{tpu_custom_call.1} parent=5 // pred_fallthru
        _
    $region6: #{tpu_custom_call.1} parent=1 // loop_footer
      %s22 = sadd.s32 1, %s18
    $region7: #{tpu_custom_call.1} parent=1 // loop_footer_branch
      %17 = sbr.rel target = $region3
    $region8: #{tpu_custom_call.1} parent=1 // loop_exit
      _
    %664 = vsyncpa [#allocation3], 1
    %s665 = scalar_lea.sflag [#allocation3], 1
    %666 = vsyncpa %s665, 1
    %667 = vsyncpa [#allocation6], 1
    %668 = vsyncpa [#allocation4], 1
    %s669 = scalar_lea.sflag [#allocation4], 1
    %670 = vsyncpa %s669, 1

</llo_original>
